<compile_context>
chip_gen: v7x
topology: tpu7x:2x2x1
jax: 0.10.0
libtpu: 0.0.40
codegen_flags: <defaults>
</compile_context>

<pallas_src>
import functools

import jax
import jax.numpy as jnp
from jax import lax
from jax.experimental import pallas as pl
from jax.experimental.pallas import tpu as pltpu


def _round_up(v, m):
    return ((v + m - 1) // m) * m


def _maxmin_kernel(x_ref, o_ref, *, R, n_valid):
    """MaxMin pooling for a (TB, Np) block of batch rows.

    x_ref: (TB, Np) block (TB rows, full -- possibly lane-padded -- region axis)
    o_ref: (TB, OUT_N) block, OUT_N = 2R padded up to a multiple of 128.
           Lane r holds the (r+1)-th largest value for r < R, lane 2R-1-r
           holds the (r+1)-th smallest; lanes >= 2R are zero.
    """
    x = x_ref[...].astype(jnp.float32)                 # (TB, Np)
    TB, Np = x.shape
    out_n = o_ref.shape[-1]

    # Stack the max path and the negated min path along sublanes so each
    # cross-lane (XLU) reduction covers both selections in one pass.
    work = jnp.concatenate([x, -x], axis=0)            # (2*TB, Np)
    col = lax.broadcasted_iota(jnp.int32, (2 * TB, Np), 1)
    if n_valid != Np:
        # Region axis was lane-padded in the wrapper: mask the pad ONCE so all
        # R iterations run on full, unmasked vregs.
        work = jnp.where(col < n_valid, work, -jnp.inf)

    out_col = lax.broadcasted_iota(jnp.int32, (TB, out_n), 1)
    out = jnp.zeros((TB, out_n), dtype=jnp.float32)
    neg_inf = jnp.float32(-jnp.inf)

    # R is small and static -> unrolled Python loop.
    # Exact equality (work == m) is safe: m is drawn bitwise from work.
    # (jnp.argmax variant intentionally not used -- see header comment.)
    for r in range(R):
        m = jnp.max(work, axis=-1, keepdims=True)                           # (2TB, 1)
        # First index attaining the extreme (ties -> lowest index); used only
        # to knock out exactly ONE element per row per iteration so value
        # multiplicities match torch.sort.
        am = jnp.min(jnp.where(work == m, col, Np), axis=-1, keepdims=True)  # (2TB, 1)
        work = jnp.where(col == am, neg_inf, work)

        top = m[:TB]          # (TB, 1)  r-th largest  -> output slot r
        bot = -m[TB:]         # (TB, 1)  r-th smallest -> output slot 2R-1-r
        out = jnp.where(out_col == r, top, out)
        out = jnp.where(out_col == (2 * R - 1 - r), bot, out)

    o_ref[...] = out.astype(o_ref.dtype)


def _hw_info():
    """(physical VMEM bytes per core, TensorCores per chip), conservative fallbacks."""
    phys_vmem = 64 << 20          # v7x per-TC VMEM: smallest in the fleet
    n_cores = 1                   # v5e / v6e
    try:
        info = pltpu.get_tpu_info()
        v = getattr(info, "vmem_capacity_bytes", None)
        if v:
            phys_vmem = int(v)
        for name in ("num_cores", "tensorcore_count", "num_tensorcores",
                     "cores_per_chip", "tensor_cores_per_chip"):
            c = getattr(info, name, None)
            if c:
                n_cores = int(c)
                break
    except Exception:
        pass
    if n_cores == 1:
        try:
            c = getattr(jax.devices()[0], "num_cores", None)
            if c:
                n_cores = int(c)
        except Exception:
            pass
    return phys_vmem, max(1, n_cores)


def _choose_tiling(B, Np, out_n, n_cores, phys_vmem):
    """Pick the per-step batch block TB (multiple of 8) and a VMEM limit."""
    # Working-set per batch row (f32 bytes): double-buffered input (2) +
    # loaded copy (1) + stacked work (2) + col iota (2) + masked-col /
    # knockout select temporaries (~3) ~= 10 copies of (1, Np), plus the
    # double-buffered lane-padded output slab.
    per_row = 10 * Np * 4 + 2 * out_n * 4
    budget = min(24 << 20, phys_vmem // 3)   # fits scoped VMEM on v5e..v7x
    tb = (budget // max(per_row, 1)) // 8 * 8
    tb = max(8, min(1024, tb))
    tb = min(tb, _round_up(B, 8))
    # Only shrink TB to feed multiple TensorCores when the chip actually has
    # them (v7x); on 1-TC chips this would only add per-step overhead.
    if n_cores >= 2 and _round_up(B, 8) >= 8 * n_cores:
        tb = min(tb, max(8, _round_up(pl.cdiv(B, n_cores), 8)))
    need = per_row * tb + (4 << 20)          # + headroom
    vmem_limit = int(max(32 << 20, min(int(phys_vmem * 0.9), need)))
    return tb, vmem_limit


def maxmin_pooling(x, R):
    """x: (B, 1, N) -> (B, 2*R)."""
    B, C, N = x.shape
    assert C == 1, "MaxMinPooling expects a single-channel 1D conv embedding"
    assert 1 <= R <= N, "requires 1 <= R <= n_regions"

    x2 = x.reshape(B, N)

    # Lane-pad the region axis only when the selection loop is long enough to
    # amortize the extra HBM copy (a ragged lane dim forces masked vregs in
    # every reduce/select of all R iterations).
    if (N % 128 != 0) and R >= 8:
        Np = _round_up(N, 128)
        x2 = jnp.pad(x2, ((0, 0), (0, Np - N)))
    else:
        Np = N

    # Lane-dense output slab: pad 2R up to a multiple of 128 so the kernel's
    # output stores are full, unmasked vector stores; slice in the wrapper.
    OUT_N = _round_up(2 * R, 128)

    phys_vmem, n_cores = _hw_info()
    TB, vmem_limit = _choose_tiling(B, Np, OUT_N, n_cores, phys_vmem)

    # No batch padding: rows are independent, so a partial last block just
    # computes garbage rows whose (out-of-bounds) output writes are dropped.
    num_steps = pl.cdiv(B, TB)

    # 3-deep input buffering only pays off when the kernel is memory-bound
    # (tiny R) and there are enough grid steps to pipeline.
    use_buf3 = (R <= 2) and (num_steps >= 3)
    if use_buf3:
        in_spec = pl.BlockSpec((TB, Np), lambda b: (b, 0),
                               pipeline_mode=pl.Buffered(3))
        vmem_limit = int(min(int(phys_vmem * 0.9), vmem_limit + TB * Np * 4))
    else:
        in_spec = pl.BlockSpec((TB, Np), lambda b: (b, 0))

    cost = pl.CostEstimate(
        flops=6 * R * B * Np,
        transcendentals=0,
        bytes_accessed=B * Np * 4 + B * OUT_N * 4,
    )

    # TODO(synk): for very large N (>= ~32-64K) add an inner "arbitrary" N-chunk
    # pipeline with a per-row running top-R/bottom-R candidate carry so VMEM
    # residency is bounded independently of N (matters on v5e/v7x).
    # TODO(synk): for tiny production N (<= 128) a lanes-on-batch transposed
    # layout would recover the idle lanes; skipped (N is large in practice).
    out = pl.pallas_call(
        functools.partial(_maxmin_kernel, R=R, n_valid=N),
        out_shape=jax.ShapeDtypeStruct((B, OUT_N), x.dtype),
        grid=(num_steps,),
        in_specs=[in_spec],
        out_specs=pl.BlockSpec((TB, OUT_N), lambda b: (b, 0)),
        compiler_params=pltpu.CompilerParams(
            dimension_semantics=("parallel",),
            vmem_limit_bytes=vmem_limit),
        cost_estimate=cost,
    )(x2)

    return out[:, : 2 * R]


def maxmin_pooling_ref(x, R):
    """Pure-JAX reference mirroring the PyTorch forward."""
    B, _, N = x.shape
    x_sorted = -jnp.sort(-x.reshape(B, N), axis=1)   # descending sort
    return jnp.concatenate([x_sorted[:, :R], x_sorted[:, N - R:]], axis=1)


if __name__ == "__main__":
    # Case 1: shapes implied by the module (batch=2, channels=1, n_regions=16).
    R, B, N = 3, 2, 16
    x = jax.random.normal(jax.random.PRNGKey(0), (B, 1, N), dtype=jnp.float32)
    out = jax.block_until_ready(maxmin_pooling(x, R))
    ref = maxmin_pooling_ref(x, R)
    assert out.shape == (B, 2 * R)
    assert jnp.allclose(out, ref, atol=1e-6, rtol=1e-6), (out, ref)

    # Case 2: partial last batch block (B % TB != 0, no wrapper-side pad) and
    # duplicate values (tie handling / value multiplicities).
    R2, B2, N2 = 4, 20, 256
    x2 = jax.random.randint(jax.random.PRNGKey(1), (B2, 1, N2), 0, 7).astype(
        jnp.float32)
    out2 = jax.block_until_ready(maxmin_pooling(x2, R2))
    ref2 = maxmin_pooling_ref(x2, R2)
    assert out2.shape == (B2, 2 * R2)
    assert jnp.allclose(out2, ref2), (out2, ref2)

    # Case 3: ragged region axis with a longer selection loop -> exercises the
    # lane-pad + in-kernel validity-mask path and overlapping top/bottom sets.
    R3, B3, N3 = 8, 5, 200
    x3 = jax.random.normal(jax.random.PRNGKey(2), (B3, 1, N3), dtype=jnp.float32)
    out3 = jax.block_until_ready(maxmin_pooling(x3, R3))
    ref3 = maxmin_pooling_ref(x3, R3)
    assert out3.shape == (B3, 2 * R3)
    assert jnp.allclose(out3, ref3, atol=1e-6, rtol=1e-6), (out3, ref3)

    print("KERNEL_OK")
</pallas_src>

<mosaic_0001>
module attributes {stable_mosaic.version = 11 : i64} {
  func.func @_maxmin_kernel(%arg0: i32, %arg1: memref<8x16xf32, #tpu.memory_space<vmem>>, %arg2: memref<8x128xf32, #tpu.memory_space<vmem>>) attributes {dimension_semantics = [#tpu.dimension_semantics<parallel>], iteration_bounds = array<i64: 1>, scalar_prefetch = 0 : i64, scratch_operands = 0 : i64, tpu.core_type = #tpu.core_type<tc>, window_params = [{transform_indices = @transform_0, window_bounds = array<i64: 8, 16>}, {transform_indices = @transform_1, window_bounds = array<i64: 8, 128>}]} {
    %c0 = arith.constant 0 : index
    %c0_0 = arith.constant 0 : index
    %0 = vector.load %arg1[%c0, %c0_0] : memref<8x16xf32, #tpu.memory_space<vmem>>, vector<8x16xf32>
    %cst = arith.constant 0.000000e+00 : f32
    %1 = vector.broadcast %cst : f32 to vector<8x16xf32>
    %2 = arith.subf %1, %0 : vector<8x16xf32>
    %3 = tpu.concatenate %0, %2 in 0 : vector<8x16xf32>, vector<8x16xf32> -> vector<16x16xf32>
    %4 = tpu.iota {dimensions = array<i32: 1>} : vector<16x16xi32>
    %5 = tpu.iota {dimensions = array<i32: 1>} : vector<8x128xi32>
    %cst_1 = arith.constant 0.000000e+00 : f32
    %6 = vector.broadcast %cst_1 : f32 to vector<8x128xf32>
    %cst_2 = arith.constant dense<0xFF800000> : vector<16xf32>
    %7 = vector.multi_reduction <maximumf>, %3, %cst_2 [1] : vector<16x16xf32> to vector<16xf32>
    %8 = vector.shape_cast %7 : vector<16xf32> to vector<16x1xf32>
    %9 = vector.broadcast %8 : vector<16x1xf32> to vector<16x16xf32>
    %10 = arith.cmpf oeq, %3, %9 : vector<16x16xf32>
    %c16_i32 = arith.constant 16 : i32
    %11 = vector.broadcast %c16_i32 : i32 to vector<16x16xi32>
    %12 = arith.select %10, %4, %11 : vector<16x16xi1>, vector<16x16xi32>
    %cst_3 = arith.constant dense<2147483647> : vector<16xi32>
    %13 = vector.multi_reduction <minsi>, %12, %cst_3 [1] : vector<16x16xi32> to vector<16xi32>
    %14 = vector.shape_cast %13 : vector<16xi32> to vector<16x1xi32>
    %15 = vector.broadcast %14 : vector<16x1xi32> to vector<16x16xi32>
    %16 = arith.cmpi eq, %4, %15 : vector<16x16xi32>
    %cst_4 = arith.constant 0xFF800000 : f32
    %17 = vector.broadcast %cst_4 : f32 to vector<16x16xf32>
    %18 = arith.select %16, %17, %3 : vector<16x16xi1>, vector<16x16xf32>
    %19 = vector.extract_strided_slice %8 {offsets = [0, 0], sizes = [8, 1], strides = [1, 1]} : vector<16x1xf32> to vector<8x1xf32>
    %20 = vector.extract_strided_slice %8 {offsets = [8, 0], sizes = [8, 1], strides = [1, 1]} : vector<16x1xf32> to vector<8x1xf32>
    %cst_5 = arith.constant 0.000000e+00 : f32
    %21 = vector.broadcast %cst_5 : f32 to vector<8x1xf32>
    %22 = arith.subf %21, %20 : vector<8x1xf32>
    %c0_i32 = arith.constant 0 : i32
    %23 = vector.broadcast %c0_i32 : i32 to vector<8x128xi32>
    %24 = arith.cmpi eq, %5, %23 : vector<8x128xi32>
    %25 = vector.shape_cast %19 : vector<8x1xf32> to vector<8x1xf32>
    %26 = vector.broadcast %25 : vector<8x1xf32> to vector<8x128xf32>
    %27 = arith.select %24, %26, %6 : vector<8x128xi1>, vector<8x128xf32>
    %c5_i32 = arith.constant 5 : i32
    %28 = vector.broadcast %c5_i32 : i32 to vector<8x128xi32>
    %29 = arith.cmpi eq, %5, %28 : vector<8x128xi32>
    %30 = vector.shape_cast %22 : vector<8x1xf32> to vector<8x1xf32>
    %31 = vector.broadcast %30 : vector<8x1xf32> to vector<8x128xf32>
    %32 = arith.select %29, %31, %27 : vector<8x128xi1>, vector<8x128xf32>
    %cst_6 = arith.constant dense<0xFF800000> : vector<16xf32>
    %33 = vector.multi_reduction <maximumf>, %18, %cst_6 [1] : vector<16x16xf32> to vector<16xf32>
    %34 = vector.shape_cast %33 : vector<16xf32> to vector<16x1xf32>
    %35 = vector.broadcast %34 : vector<16x1xf32> to vector<16x16xf32>
    %36 = arith.cmpf oeq, %18, %35 : vector<16x16xf32>
    %c16_i32_7 = arith.constant 16 : i32
    %37 = vector.broadcast %c16_i32_7 : i32 to vector<16x16xi32>
    %38 = arith.select %36, %4, %37 : vector<16x16xi1>, vector<16x16xi32>
    %cst_8 = arith.constant dense<2147483647> : vector<16xi32>
    %39 = vector.multi_reduction <minsi>, %38, %cst_8 [1] : vector<16x16xi32> to vector<16xi32>
    %40 = vector.shape_cast %39 : vector<16xi32> to vector<16x1xi32>
    %41 = vector.broadcast %40 : vector<16x1xi32> to vector<16x16xi32>
    %42 = arith.cmpi eq, %4, %41 : vector<16x16xi32>
    %cst_9 = arith.constant 0xFF800000 : f32
    %43 = vector.broadcast %cst_9 : f32 to vector<16x16xf32>
    %44 = arith.select %42, %43, %18 : vector<16x16xi1>, vector<16x16xf32>
    %45 = vector.extract_strided_slice %34 {offsets = [0, 0], sizes = [8, 1], strides = [1, 1]} : vector<16x1xf32> to vector<8x1xf32>
    %46 = vector.extract_strided_slice %34 {offsets = [8, 0], sizes = [8, 1], strides = [1, 1]} : vector<16x1xf32> to vector<8x1xf32>
    %cst_10 = arith.constant 0.000000e+00 : f32
    %47 = vector.broadcast %cst_10 : f32 to vector<8x1xf32>
    %48 = arith.subf %47, %46 : vector<8x1xf32>
    %c1_i32 = arith.constant 1 : i32
    %49 = vector.broadcast %c1_i32 : i32 to vector<8x128xi32>
    %50 = arith.cmpi eq, %5, %49 : vector<8x128xi32>
    %51 = vector.shape_cast %45 : vector<8x1xf32> to vector<8x1xf32>
    %52 = vector.broadcast %51 : vector<8x1xf32> to vector<8x128xf32>
    %53 = arith.select %50, %52, %32 : vector<8x128xi1>, vector<8x128xf32>
    %c4_i32 = arith.constant 4 : i32
    %54 = vector.broadcast %c4_i32 : i32 to vector<8x128xi32>
    %55 = arith.cmpi eq, %5, %54 : vector<8x128xi32>
    %56 = vector.shape_cast %48 : vector<8x1xf32> to vector<8x1xf32>
    %57 = vector.broadcast %56 : vector<8x1xf32> to vector<8x128xf32>
    %58 = arith.select %55, %57, %53 : vector<8x128xi1>, vector<8x128xf32>
    %cst_11 = arith.constant dense<0xFF800000> : vector<16xf32>
    %59 = vector.multi_reduction <maximumf>, %44, %cst_11 [1] : vector<16x16xf32> to vector<16xf32>
    %60 = vector.shape_cast %59 : vector<16xf32> to vector<16x1xf32>
    %61 = vector.extract_strided_slice %60 {offsets = [0, 0], sizes = [8, 1], strides = [1, 1]} : vector<16x1xf32> to vector<8x1xf32>
    %62 = vector.extract_strided_slice %60 {offsets = [8, 0], sizes = [8, 1], strides = [1, 1]} : vector<16x1xf32> to vector<8x1xf32>
    %cst_12 = arith.constant 0.000000e+00 : f32
    %63 = vector.broadcast %cst_12 : f32 to vector<8x1xf32>
    %64 = arith.subf %63, %62 : vector<8x1xf32>
    %c2_i32 = arith.constant 2 : i32
    %65 = vector.broadcast %c2_i32 : i32 to vector<8x128xi32>
    %66 = arith.cmpi eq, %5, %65 : vector<8x128xi32>
    %67 = vector.shape_cast %61 : vector<8x1xf32> to vector<8x1xf32>
    %68 = vector.broadcast %67 : vector<8x1xf32> to vector<8x128xf32>
    %69 = arith.select %66, %68, %58 : vector<8x128xi1>, vector<8x128xf32>
    %c3_i32 = arith.constant 3 : i32
    %70 = vector.broadcast %c3_i32 : i32 to vector<8x128xi32>
    %71 = arith.cmpi eq, %5, %70 : vector<8x128xi32>
    %72 = vector.shape_cast %64 : vector<8x1xf32> to vector<8x1xf32>
    %73 = vector.broadcast %72 : vector<8x1xf32> to vector<8x128xf32>
    %74 = arith.select %71, %73, %69 : vector<8x128xi1>, vector<8x128xf32>
    %c0_13 = arith.constant 0 : index
    %c0_14 = arith.constant 0 : index
    %75 = vector.load %arg2[%c0_13, %c0_14] : memref<8x128xf32, #tpu.memory_space<vmem>>, vector<8x128xf32>
    tpu.vector_store %arg2[%c0_13, %c0_14], %74 {strides = array<i32>} : memref<8x128xf32, #tpu.memory_space<vmem>>, vector<8x128xf32>,
    return
  }
  func.func @transform_0(%arg0: i32) -> (i32, i32) {
    %c0_i32 = arith.constant 0 : i32
    %c0_i32_0 = arith.constant 0 : i32
    return %arg0, %c0_i32 : i32, i32
  }
  func.func @transform_1(%arg0: i32) -> (i32, i32) {
    %c0_i32 = arith.constant 0 : i32
    %c0_i32_0 = arith.constant 0 : i32
    return %arg0, %c0_i32 : i32, i32
  }
}

</mosaic_0001>

<llo_original>
// kernel: tpu_custom_call.1
$region0: #{tpu_custom_call.1}
  #allocation0 [shape = 'u32[]', space=smem, size = 0x4, offset = 0x4, fixed_abs, tag = 'smem constant byte address 0x4 - core index']
  #allocation1 [shape = 'u32[144,128]{1,0:T(1,128)}', space=vmem, size = 0x12000, scoped, tag = 'internal scratch']
  %s0 = inlined_call_operand.hbm [shape: f32[2,16], index: 0, kind: input, shape index: {}]
  %s1 = inlined_call_operand.hbm [shape: f32[2,128], index: 1, kind: output, shape index: {}]
  %s2 = sld [smem:[#allocation0]]
  $region18: #{tpu_custom_call.1} parent=0
    _
  %s4 = ssub.s32 1, %s2
  %s5 = scalar_select 0, %s4, %s2
  $region1: #{tpu_custom_call.1} parent=0
    #allocation2 [shape = 'u8[4096]{0}', space=vmem, size = 0x1000, scoped, tag = 'input window, operand 0, single buffered']
    #allocation3 [shape = 's32[1]{0}', space=sflag, size = 0x4, scoped, tag = 'scoped memory for tpu_custom_call.1']
    #allocation4 [shape = 's32[1]{0}', space=sflag, size = 0x4, scoped, tag = 'scoped memory for tpu_custom_call.1']
    #allocation5 [shape = 'u8[4096]{0}', space=vmem, size = 0x1000, scoped, tag = 'output window, operand 0, single buffered']
    %6 = vsyncpa [#allocation3], 0
    %7 = vsyncpa [#allocation4], 0
    // Predicated region
    $region2: #{tpu_custom_call.1} parent=1 // pred_check
      _
    $region3: #{tpu_custom_call.1} parent=1 // pred_check_branch
      %9 = sbr.rel (0) target = $region5
    $region4: #{tpu_custom_call.1} parent=1 // pred_region
      %s11 = ssub.s32 128, 32
      %12 = vsyncadd [#allocation3], %s11
      %s13 = sshll.u32 [#allocation2], 4
      %s14 = int_to_ptr.vmem [resolvable:$true] %s13
      %19 = dma.hbm_to_vmem [thread:$0]  %s0, 32, %s14, [#allocation3], 32, 32, 2
    $region5: #{tpu_custom_call.1} parent=1 // pred_fallthru
      _
    // Predicated region
    $region6: #{tpu_custom_call.1} parent=1 // pred_check
      _
    $region7: #{tpu_custom_call.1} parent=1 // pred_check_branch
      %21 = sbr.rel (0) target = $region9
    $region8: #{tpu_custom_call.1} parent=1 // pred_region
      %22 = dma.done [#allocation3], 128
    $region9: #{tpu_custom_call.1} parent=1 // pred_fallthru
      _
    %v23 = vld [vmem:[#allocation2] sm:$0xff]
    %v24 = vsub.f32 0.0, %v23
    %v25 = vlaneseq
    %v26 = vand.u32 %v25, 127
    %vm27 = vcmask 130048
    %v28 = vsel %vm27, %v23, -inf
    %29 = vmax.xlane.f32.xlu0 %v28
    %v30 = vpop.xlane.xlu0 %29
    %v31 = vsel %vm27, %v24, -inf
    %32 = vmax.xlane.f32.xlu0 %v31
    %v33 = vpop.xlane.xlu0 %32
    %vm34 = vcmp.eq.f32.partialorder %v23, %v30
    %vm35 = vcmp.eq.f32.partialorder %v24, %v33
    %v36 = vsel %vm34, %v26, 16
    %v37 = vsel %vm35, %v26, 16
    %v38 = vsel %vm27, %v36, 2147483647
    %v39 = vand.u32 %v38, 65535
    %v40 = vshra.s32 %v38, 16
    %v41 = vcvt.s32.f32 %v39
    %v42 = vcvt.s32.f32 %v40
    %43 = vmin.xlane.f32.xlu0 %v42
    %v44 = vpop.xlane.xlu0 %43
    %vm45 = vcmp.eq.f32.partialorder %v42, %v44
    %v46 = vsel %vm45, %v41, inf
    %47 = vmin.xlane.f32.xlu0 %v46
    %v48 = vpop.xlane.xlu0 %47
    %v49 = vcvt.f32.s32 %v48
    %v50 = vcvt.f32.s32 %v44
    %v51 = vshll.u32 %v50, 16
    %v52 = vadd.s32 %v51, %v49
    %v53 = vsel %vm27, %v37, 2147483647
    %v54 = vand.u32 %v53, 65535
    %v55 = vshra.s32 %v53, 16
    %v56 = vcvt.s32.f32 %v54
    %v57 = vcvt.s32.f32 %v55
    %58 = vmin.xlane.f32.xlu0 %v57
    %v59 = vpop.xlane.xlu0 %58
    %vm60 = vcmp.eq.f32.partialorder %v57, %v59
    %v61 = vsel %vm60, %v56, inf
    %62 = vmin.xlane.f32.xlu0 %v61
    %v63 = vpop.xlane.xlu0 %62
    %v64 = vcvt.f32.s32 %v63
    %v65 = vcvt.f32.s32 %v59
    %v66 = vshll.u32 %v65, 16
    %v67 = vadd.s32 %v66, %v64
    %vm68 = vcmp.eq.s32.totalorder %v26, %v52
    %vm69 = vcmp.eq.s32.totalorder %v26, %v67
    %v70 = vsel %vm68, -inf, %v23
    %v71 = vsel %vm69, -inf, %v24
    %v72 = vsub.f32 0.0, %v33
    %vm73 = vcmp.eq.s32.totalorder %v26, 0
    %v74 = vsel %vm73, %v30, 0.0
    %vm75 = vcmp.eq.s32.totalorder %v26, 5
    %v76 = vsel %vm75, %v72, %v74
    %v77 = vsel %vm27, %v70, -inf
    %78 = vmax.xlane.f32.xlu0 %v77
    %v79 = vpop.xlane.xlu0 %78
    %v80 = vsel %vm27, %v71, -inf
    %81 = vmax.xlane.f32.xlu0 %v80
    %v82 = vpop.xlane.xlu0 %81
    %vm83 = vcmp.eq.f32.partialorder %v70, %v79
    %vm84 = vcmp.eq.f32.partialorder %v71, %v82
    %v85 = vsel %vm83, %v26, 16
    %v86 = vsel %vm84, %v26, 16
    %v87 = vsel %vm27, %v85, 2147483647
    %v88 = vand.u32 %v87, 65535
    %v89 = vshra.s32 %v87, 16
    %v90 = vcvt.s32.f32 %v88
    %v91 = vcvt.s32.f32 %v89
    %92 = vmin.xlane.f32.xlu0 %v91
    %v93 = vpop.xlane.xlu0 %92
    %vm94 = vcmp.eq.f32.partialorder %v91, %v93
    %v95 = vsel %vm94, %v90, inf
    %96 = vmin.xlane.f32.xlu0 %v95
    %v97 = vpop.xlane.xlu0 %96
    %v98 = vcvt.f32.s32 %v97
    %v99 = vcvt.f32.s32 %v93
    %v100 = vshll.u32 %v99, 16
    %v101 = vadd.s32 %v100, %v98
    %v102 = vsel %vm27, %v86, 2147483647
    %v103 = vand.u32 %v102, 65535
    %v104 = vshra.s32 %v102, 16
    %v105 = vcvt.s32.f32 %v103
    %v106 = vcvt.s32.f32 %v104
    %107 = vmin.xlane.f32.xlu0 %v106
    %v108 = vpop.xlane.xlu0 %107
    %vm109 = vcmp.eq.f32.partialorder %v106, %v108
    %v110 = vsel %vm109, %v105, inf
    %111 = vmin.xlane.f32.xlu0 %v110
    %v112 = vpop.xlane.xlu0 %111
    %v113 = vcvt.f32.s32 %v112
    %v114 = vcvt.f32.s32 %v108
    %v115 = vshll.u32 %v114, 16
    %v116 = vadd.s32 %v115, %v113
    %vm117 = vcmp.eq.s32.totalorder %v26, %v101
    %vm118 = vcmp.eq.s32.totalorder %v26, %v116
    %v119 = vsel %vm117, -inf, %v70
    %v120 = vsel %vm118, -inf, %v71
    %v121 = vsub.f32 0.0, %v82
    %vm122 = vcmp.eq.s32.totalorder %v26, 1
    %v123 = vsel %vm122, %v79, %v76
    %vm124 = vcmp.eq.s32.totalorder %v26, 4
    %v125 = vsel %vm124, %v121, %v123
    %v126 = vsel %vm27, %v119, -inf
    %127 = vmax.xlane.f32.xlu0 %v126
    %v128 = vpop.xlane.xlu0 %127
    %v129 = vsel %vm27, %v120, -inf
    %130 = vmax.xlane.f32.xlu0 %v129
    %v131 = vpop.xlane.xlu0 %130
    %v132 = vsub.f32 0.0, %v131
    %vm133 = vcmp.eq.s32.totalorder %v26, 2
    %v134 = vsel %vm133, %v128, %v125
    %vm135 = vcmp.eq.s32.totalorder %v26, 3
    %v136 = vsel %vm135, %v132, %v134
    %137 = vst [vmem:[#allocation5] sm:$0xff] %v136
    // Predicated region
    $region10: #{tpu_custom_call.1} parent=1 // pred_check
      _
    $region11: #{tpu_custom_call.1} parent=1 // pred_check_branch
      %139 = sbr.rel (0) target = $region13
    $region12: #{tpu_custom_call.1} parent=1 // pred_region
      %s141 = ssub.s32 128, 32
      %142 = vsyncadd [#allocation4], %s141
      %s143 = sshll.u32 [#allocation5], 4
      %s144 = int_to_ptr.vmem [resolvable:$true] %s143
      %149 = dma.vmem_to_hbm [thread:$0]  %s144, 32, %s1, [#allocation4], 32, 32, 2
    $region13: #{tpu_custom_call.1} parent=1 // pred_fallthru
      _
    // Predicated region
    $region14: #{tpu_custom_call.1} parent=1 // pred_check
      _
    $region15: #{tpu_custom_call.1} parent=1 // pred_check_branch
      %151 = sbr.rel (0) target = $region17
    $region16: #{tpu_custom_call.1} parent=1 // pred_region
      %152 = dma.done [#allocation4], 128
    $region17: #{tpu_custom_call.1} parent=1 // pred_fallthru
      _
    %153 = vsyncpa [#allocation3], 1
    %154 = vsyncpa [#allocation4], 1

</llo_original>
